<compile_context>
chip_gen: v7x
topology: tpu7x:2x2x1
jax: 0.10.0
libtpu: 0.0.40
codegen_flags: <defaults>
</compile_context>

<pallas_src>
import functools

import jax
import jax.numpy as jnp
from jax.experimental import pallas as pl
from jax.experimental.pallas import tpu as pltpu


def _dropout2d_kernel(x_ref, scale_ref, o_ref):
    # x_ref / o_ref: (r_blk, c_blk) lane-dense tile; scale_ref: (r_blk, 1) per-row scale.
    # Single broadcast multiply-and-store: stays minimal for v5e's single vst slot and
    # runs natively in bf16 on v6e/v7x (scale is precomputed in the compute dtype).
    o_ref[...] = (x_ref[...] * scale_ref[...]).astype(o_ref.dtype)


def _pick_blocks(rows, cols, itemsize, target_bytes=4 * 1024 * 1024):
    """Pick a (row_block, col_block) with ~target_bytes per tile.

    Last dim stays the full H*W (always legal, lane-dense for typical CNN sizes) unless
    even an 8-row stripe would blow the budget, in which case it is blocked in multiples
    of 128. Row block is a multiple of 8 (or the full row count).
    """
    if cols % 128 == 0 and 8 * cols * itemsize > target_bytes:
        c_blk = max(128, (target_bytes // (8 * itemsize)) // 128 * 128)
        c_blk = min(c_blk, cols)
    else:
        c_blk = cols
    max_rows = max(1, target_bytes // (c_blk * itemsize))
    if rows <= max_rows:
        r_blk = rows                      # full extent is always a legal block dim
    else:
        r_blk = max(8, (max_rows // 8) * 8)
    return r_blk, c_blk


@functools.partial(jax.jit, static_argnames=("dropout", "training"))
def dropout2d(x, key, dropout=0.5, training=True):
    """Pallas TPU implementation of the PyTorch Dropout2d module's forward pass."""
    if not training:
        return x

    N, C, H, W = x.shape
    p = 1.0 - float(dropout)
    if p <= 0.0:
        # dropout >= 1: every channel is dropped; avoid 0 * inf = NaN and return zeros.
        return jnp.zeros_like(x)

    rows, cols = N * C, H * W

    # Exact reproduction of torch.floor(torch.rand([N, C, 1, 1]) + p):
    u = jax.random.uniform(key, (N, C, 1, 1), dtype=jnp.float32)
    r = jnp.floor(u + p)                                   # 1 with prob p, 0 with prob dropout
    scale_dtype = x.dtype if jnp.issubdtype(x.dtype, jnp.floating) else jnp.float32
    scale = (r * (1.0 / p)).reshape(rows, 1).astype(scale_dtype)   # 0 or 1/p, per (n, c)

    # Row-major flatten keeps NCHW contiguity: row index == n*C + c, columns == H*W.
    x2d = x.reshape(rows, cols)
    r_blk, c_blk = _pick_blocks(rows, cols, x2d.dtype.itemsize)
    grid = (pl.cdiv(rows, r_blk), pl.cdiv(cols, c_blk))

    out2d = pl.pallas_call(
        _dropout2d_kernel,
        out_shape=jax.ShapeDtypeStruct((rows, cols), x.dtype),
        grid=grid,
        in_specs=[
            pl.BlockSpec((r_blk, c_blk), lambda i, j: (i, j)),   # x tile
            pl.BlockSpec((r_blk, 1), lambda i, j: (i, 0)),       # per-row scale
        ],
        out_specs=pl.BlockSpec((r_blk, c_blk), lambda i, j: (i, j)),
        compiler_params=pltpu.CompilerParams(
            dimension_semantics=("parallel", "parallel"),
            vmem_limit_bytes=48 * 1024 * 1024,
        ),
    )(x2d, scale)
    return out2d.reshape(N, C, H, W)


if __name__ == "__main__":
    key = jax.random.PRNGKey(0)
    kx, kmask, kx2 = jax.random.split(key, 3)

    # ---- f32 case (module's typical use) -------------------------------------------
    N, C, H, W = 2, 4, 16, 16
    x = jax.random.normal(kx, (N, C, H, W), dtype=jnp.float32)
    dropout = 0.5

    out = jax.block_until_ready(dropout2d(x, kmask, dropout=dropout, training=True))

    # Pure-JAX reference with the identical mask construction.
    p = 1.0 - dropout
    u = jax.random.uniform(kmask, (N, C, 1, 1), dtype=jnp.float32)
    r = jnp.floor(u + p)
    expected = x * r / p

    assert out.shape == x.shape and out.dtype == x.dtype
    assert jnp.allclose(out, expected, atol=1e-6, rtol=1e-6)

    # ---- bf16 case exercising multi-channel lane-dense tiles -------------------------
    xb = jax.random.normal(kx2, (2, 16, 32, 32), dtype=jnp.bfloat16)
    outb = jax.block_until_ready(dropout2d(xb, kmask, dropout=dropout, training=True))
    ub = jax.random.uniform(kmask, (2, 16, 1, 1), dtype=jnp.float32)
    rb = jnp.floor(ub + p)
    expb = (xb.astype(jnp.float32) * rb / p).astype(jnp.bfloat16)
    assert outb.shape == xb.shape and outb.dtype == xb.dtype
    assert jnp.allclose(outb.astype(jnp.float32), expb.astype(jnp.float32),
                        atol=1e-2, rtol=1e-2)

    # ---- eval mode is identity; dropout=1.0 is guarded to all-zeros ------------------
    out_eval = dropout2d(x, kmask, dropout=dropout, training=False)
    assert jnp.array_equal(out_eval, x)
    out_all_drop = jax.block_until_ready(dropout2d(x, kmask, dropout=1.0, training=True))
    assert jnp.array_equal(out_all_drop, jnp.zeros_like(x))

    print("KERNEL_OK")
</pallas_src>

<mosaic_0001>
module attributes {stable_mosaic.version = 11 : i64} {
  func.func @_dropout2d_kernel(%arg0: i32, %arg1: i32, %arg2: memref<8x256xf32, #tpu.memory_space<vmem>>, %arg3: memref<8x1xf32, #tpu.memory_space<vmem>>, %arg4: memref<8x256xf32, #tpu.memory_space<vmem>>) attributes {dimension_semantics = [#tpu.dimension_semantics<parallel>, #tpu.dimension_semantics<parallel>], iteration_bounds = array<i64: 1, 1>, scalar_prefetch = 0 : i64, scratch_operands = 0 : i64, tpu.core_type = #tpu.core_type<tc>, window_params = [{transform_indices = @transform_0, window_bounds = array<i64: 8, 256>}, {transform_indices = @transform_1, window_bounds = array<i64: 8, 1>}, {transform_indices = @transform_2, window_bounds = array<i64: 8, 256>}]} {
    %c0 = arith.constant 0 : index
    %c0_0 = arith.constant 0 : index
    %0 = vector.load %arg2[%c0, %c0_0] : memref<8x256xf32, #tpu.memory_space<vmem>>, vector<8x256xf32>
    %c0_1 = arith.constant 0 : index
    %c0_2 = arith.constant 0 : index
    %1 = vector.load %arg3[%c0_1, %c0_2] : memref<8x1xf32, #tpu.memory_space<vmem>>, vector<8x1xf32>
    %2 = vector.broadcast %1 : vector<8x1xf32> to vector<8x256xf32>
    %3 = arith.mulf %0, %2 : vector<8x256xf32>
    %c0_3 = arith.constant 0 : index
    %c0_4 = arith.constant 0 : index
    %4 = vector.load %arg4[%c0_3, %c0_4] : memref<8x256xf32, #tpu.memory_space<vmem>>, vector<8x256xf32>
    tpu.vector_store %arg4[%c0_3, %c0_4], %3 {strides = array<i32>} : memref<8x256xf32, #tpu.memory_space<vmem>>, vector<8x256xf32>,
    return
  }
  func.func @transform_0(%arg0: i32, %arg1: i32) -> (i32, i32) {
    %c0_i32 = arith.constant 0 : i32
    return %arg0, %arg1 : i32, i32
  }
  func.func @transform_1(%arg0: i32, %arg1: i32) -> (i32, i32) {
    %c0_i32 = arith.constant 0 : i32
    %c0_i32_0 = arith.constant 0 : i32
    return %arg0, %c0_i32 : i32, i32
  }
  func.func @transform_2(%arg0: i32, %arg1: i32) -> (i32, i32) {
    %c0_i32 = arith.constant 0 : i32
    return %arg0, %arg1 : i32, i32
  }
}

</mosaic_0001>

<llo_original>
// kernel: dropout2d.1
$region0: #{dropout2d.1}
  #allocation0 [shape = 'u32[]', space=smem, size = 0x4, offset = 0x4, fixed_abs, tag = 'smem constant byte address 0x4 - core index']
  #allocation1 [shape = 'u32[144,128]{1,0:T(1,128)}', space=vmem, size = 0x12000, scoped, tag = 'internal scratch']
  %s0 = inlined_call_operand.vmem [shape: f32[8,256], index: 0, kind: input, shape index: {}]
  %s1 = inlined_call_operand.vmem [shape: f32[8,1], index: 1, kind: input, shape index: {}]
  %s2 = inlined_call_operand.vmem [shape: f32[8,256], index: 2, kind: output, shape index: {}]
  %s3 = sld [smem:[#allocation0]]
  $region18: #{dropout2d.1} parent=0
    _
  %s5 = ssub.s32 1, %s3
  %s6 = scalar_select 0, %s5, %s3
  // Predicated region
  $region2: #{dropout2d.1} parent=0 // pred_check
    _
  $region3: #{dropout2d.1} parent=0 // pred_check_branch
    %8 = sbr.rel (0) target = $region5
  $region4: #{dropout2d.1} parent=0 // pred_region
    _
  $region5: #{dropout2d.1} parent=0 // pred_fallthru
    _
  // Predicated region
  $region6: #{dropout2d.1} parent=0 // pred_check
    _
  $region7: #{dropout2d.1} parent=0 // pred_check_branch
    %10 = sbr.rel (0) target = $region9
  $region8: #{dropout2d.1} parent=0 // pred_region
    _
  $region9: #{dropout2d.1} parent=0 // pred_fallthru
    _
  %v11 = vld [vmem:[%s0] sm:$0xff]
  %v12 = vld [vmem:[%s0 + $0x8] sm:$0xff]
  %v13 = vld [vmem:[%s1] sm:$0xff]
  %15 = vset.pattern.permute.xlu0 0
  %16 = vperm.xlu0 %15, %v13
  %v17 = vpop.permute.xlu0 %16
  %v19 = vmul.f32 %v11, %v17
  %v20 = vmul.f32 %v12, %v17
  %21 = vst [vmem:[%s2] sm:$0xff] %v19
  %22 = vst [vmem:[%s2 + $0x8] sm:$0xff] %v20
  // Predicated region
  $region10: #{dropout2d.1} parent=0 // pred_check
    _
  $region11: #{dropout2d.1} parent=0 // pred_check_branch
    %24 = sbr.rel (0) target = $region13
  $region12: #{dropout2d.1} parent=0 // pred_region
    _
  $region13: #{dropout2d.1} parent=0 // pred_fallthru
    _
  // Predicated region
  $region14: #{dropout2d.1} parent=0 // pred_check
    _
  $region15: #{dropout2d.1} parent=0 // pred_check_branch
    %26 = sbr.rel (0) target = $region17
  $region16: #{dropout2d.1} parent=0 // pred_region
    _
  $region17: #{dropout2d.1} parent=0 // pred_fallthru
    _

</llo_original>
